<compile_context>
chip_gen: v7x
topology: tpu7x:2x2x1
jax: 0.10.0
libtpu: 0.0.40
codegen_flags: <defaults>
</compile_context>

<pallas_src>
import functools
import math

import jax
import jax.numpy as jnp
from jax.experimental import pallas as pl
from jax.experimental.pallas import tpu as pltpu


def _round_up(x, m):
    return ((x + m - 1) // m) * m


def _clamp_id(tok, vocab):
    # TODO(synk): nn.Embedding raises on out-of-range ids; a hardware gather
    # cannot, so out-of-range ids are clamped to [0, vocab-1] instead.
    return jnp.minimum(jnp.maximum(tok, 0), vocab - 1)


# ---------------------------------------------------------------------------
# Fast path: whole LUT resident in VMEM, in-VMEM row gather (small tables).
# ---------------------------------------------------------------------------
def _embedding_vmem_kernel(ids_ref, lut_ref, o_ref, *, tn, vocab, scale):
    """ids_ref: SMEM (n_pad,) i32 | lut_ref: VMEM (vocab, d) | o_ref: VMEM (tn, d)."""
    base = pl.program_id(0) * tn

    def body(t, carry):
        row = _clamp_id(ids_ref[base + t], vocab)
        vec = lut_ref[pl.ds(row, 1), :].astype(jnp.float32) * scale
        o_ref[pl.ds(t, 1), :] = vec.astype(o_ref.dtype)
        return carry

    # TODO(synk): for d_model < 128 the per-token stores are lane-masked; a
    # lane-dense packed output (128 // d_model tokens per row) would be faster
    # but is moot for production d_model that is a multiple of 128.
    jax.lax.fori_loop(0, tn, body, 0, unroll=8)


# ---------------------------------------------------------------------------
# HBM path: windowed row-DMA gather directly into the output tile.
# ---------------------------------------------------------------------------
def _embedding_hbm_kernel(ids_ref, lut_ref, o_ref, sems, *, tn, vocab, cs, w, scale):
    """ids_ref: SMEM (n_pad,) i32 | lut_ref: HBM (vocab, d) via pl.ANY |
    o_ref: VMEM (tn, d), also the DMA landing buffer | sems: DMA sems (w,)."""
    base = pl.program_id(0) * tn
    nc = tn // cs                      # chunks per tile (static)

    def read_rows(c):
        # SMEM scalar reads hoisted ahead of any DMA wait.
        return [_clamp_id(ids_ref[base + c * cs + j], vocab) for j in range(cs)]

    def issue_chunk(c, rows):
        slot = c % w
        for j, row in enumerate(rows):
            pltpu.make_async_copy(
                lut_ref.at[pl.ds(row, 1), :],
                o_ref.at[pl.ds(c * cs + j, 1), :],
                sems.at[slot],
            ).start()

    def wait_chunk(c):
        slot = c % w
        for j in range(cs):
            # Shape-matched wait: every copy on sems[slot] has the identical
            # (1, d) byte count, so each wait retires exactly one row copy.
            pltpu.make_async_copy(
                lut_ref.at[pl.ds(0, 1), :],
                o_ref.at[pl.ds(c * cs + j, 1), :],
                sems.at[slot],
            ).wait()

    def scale_chunk(c):
        start = c * cs
        if not isinstance(start, int):
            start = pl.multiple_of(start, cs)
        blk = o_ref[pl.ds(start, cs), :].astype(jnp.float32) * scale
        o_ref[pl.ds(start, cs), :] = blk.astype(o_ref.dtype)

    # Prime the in-flight window (static unroll: w, cs are Python ints).
    for c in range(w):
        issue_chunk(c, read_rows(c))

    # Steady state: pre-read next chunk's ids, retire chunk c, refill the slot
    # with chunk c+w, then scale+store chunk c while later rows are in flight.
    def steady(c, carry):
        nxt_rows = read_rows(c + w)
        wait_chunk(c)
        issue_chunk(c + w, nxt_rows)
        scale_chunk(c)
        return carry

    jax.lax.fori_loop(0, nc - w, steady, 0)

    # Drain: each chunk's scale/store still overlaps the copies behind it.
    for c in range(nc - w, nc):
        wait_chunk(c)
        scale_chunk(c)


# ---------------------------------------------------------------------------
# Wrapper
# ---------------------------------------------------------------------------
def embeddings_forward(x, lut, d_model=None, *, tn=512, max_inflight_rows=64,
                       lut_vmem_budget_bytes=16 * 1024 * 1024):
    """Pallas equivalent of: nn.Embedding(vocab, d_model)(x.long()) * sqrt(d_model)."""
    B, S = x.shape
    vocab, dm = lut.shape
    if d_model is None:
        d_model = dm
    assert dm == d_model
    n = B * S
    itemsize = jnp.dtype(lut.dtype).itemsize

    # Token tile: multiple of 8 sublanes, clamped for tiny inputs, and split so
    # the grid has >= 2 steps whenever possible (v7x: 2 TensorCores share it).
    tn = _round_up(max(8, min(tn, _round_up(n, 8))), 8)
    if n > 8 and _round_up(n, tn) // tn < 2:
        tn = _round_up(max(8, (n + 1) // 2), 8)
    n_pad = _round_up(n, tn)

    ids = x.reshape(-1).astype(jnp.int32)
    if n_pad != n:
        ids = jnp.pad(ids, (0, n_pad - n))   # padded tail gathers row 0, sliced off below

    scale = float(math.sqrt(d_model))
    grid = (n_pad // tn,)

    lut_bytes = vocab * d_model * itemsize
    out_tile_bytes = tn * d_model * itemsize
    use_vmem_lut = lut_bytes <= lut_vmem_budget_bytes

    if use_vmem_lut:
        # Small table: keep the whole LUT resident in VMEM; gather with
        # in-VMEM dynamic slices (no per-row HBM DMAs at all).
        kernel = functools.partial(_embedding_vmem_kernel,
                                   tn=tn, vocab=vocab, scale=scale)
        lut_spec = pl.BlockSpec((vocab, d_model), lambda i, _ids: (0, 0))
        scratch_shapes = []
        vmem_need = 2 * lut_bytes + 2 * out_tile_bytes
    else:
        # Large table: HBM-resident LUT, windowed row-DMA gather straight into
        # the output tile (no gbuf scratch), chunked retire + fused scale.
        cs = 8                                               # sublane-aligned chunk
        w = max(1, min(max_inflight_rows // cs, tn // cs))   # chunks in flight
        kernel = functools.partial(_embedding_hbm_kernel,
                                   tn=tn, vocab=vocab, cs=cs, w=w, scale=scale)
        lut_spec = pl.BlockSpec(memory_space=pl.ANY)
        scratch_shapes = [pltpu.SemaphoreType.DMA((w,))]
        vmem_need = 2 * out_tile_bytes

    cost = pl.CostEstimate(
        flops=n_pad * d_model,
        transcendentals=0,
        bytes_accessed=2 * n_pad * d_model * itemsize + n_pad * 4 + lut_bytes)

    # Explicit scoped-VMEM budget (v6e default scoped limit is 32 MiB, v7x
    # physical VMEM is 64 MiB) -- keep headroom but never exceed v7x physical.
    vmem_limit = int(min(64 * 1024 * 1024, max(16 * 1024 * 1024, 2 * vmem_need)))

    out = pl.pallas_call(
        kernel,
        out_shape=jax.ShapeDtypeStruct((n_pad, d_model), lut.dtype),
        grid_spec=pltpu.PrefetchScalarGridSpec(
            num_scalar_prefetch=1,                           # ids -> SMEM
            grid=grid,
            in_specs=[lut_spec],
            out_specs=pl.BlockSpec((tn, d_model), lambda i, _ids: (i, 0)),
            scratch_shapes=scratch_shapes,
        ),
        compiler_params=pltpu.CompilerParams(
            dimension_semantics=("parallel",),               # v7x: 2 TCs split the grid
            vmem_limit_bytes=vmem_limit),
        cost_estimate=cost,
    )(ids, lut)

    if n_pad != n:
        out = out[:n]
    return out.reshape(B, S, d_model)


if __name__ == "__main__":
    # Small shapes consistent with the module: batch=2, seq=8, vocab=11, d_model=32
    B, S, VOCAB, D_MODEL = 2, 8, 11, 32

    key = jax.random.PRNGKey(0)
    k_lut, k_ids = jax.random.split(key)

    # nn.Embedding default init ~ N(0, 1)
    lut = jax.random.normal(k_lut, (VOCAB, D_MODEL), dtype=jnp.float32)
    x = jax.random.randint(k_ids, (B, S), 0, VOCAB, dtype=jnp.int32)

    ref = jnp.take(lut, x, axis=0) * math.sqrt(D_MODEL)

    # VMEM-resident fast path (the demo regime: 11 x 32 f32 table).
    out = jax.block_until_ready(embeddings_forward(x, lut, D_MODEL))
    assert out.shape == (B, S, D_MODEL)
    assert jnp.allclose(out, ref, atol=1e-5, rtol=1e-5), "fast path mismatch vs reference"

    # Also exercise the HBM row-gather path (forced by zeroing the VMEM budget).
    out_hbm = jax.block_until_ready(
        embeddings_forward(x, lut, D_MODEL, lut_vmem_budget_bytes=0))
    assert jnp.allclose(out_hbm, ref, atol=1e-5, rtol=1e-5), "hbm path mismatch vs reference"

    print("KERNEL_OK")
</pallas_src>

<mosaic_0001>
module attributes {stable_mosaic.version = 11 : i64} {
  func.func @_embedding_vmem_kernel(%arg0: i32, %arg1: memref<16xi32, #tpu.memory_space<smem>>, %arg2: memref<11x32xf32, #tpu.memory_space<vmem>>, %arg3: memref<8x32xf32, #tpu.memory_space<vmem>>) attributes {dimension_semantics = [#tpu.dimension_semantics<parallel>], iteration_bounds = array<i64: 2>, scalar_prefetch = 1 : i64, scratch_operands = 0 : i64, tpu.core_type = #tpu.core_type<tc>, window_params = [{pipeline_mode = #tpu.pipeline_mode<synchronous>, transform_indices = @transform_0, window_bounds = array<i64: 11, 32>}, {transform_indices = @transform_1, window_bounds = array<i64: 8, 32>}]} {
    %c8_i32 = arith.constant 8 : i32
    %0 = arith.muli %arg0, %c8_i32 : i32
    %c0_i32 = arith.constant 0 : i32
    %1 = arith.addi %0, %c0_i32 : i32
    %2 = arith.index_cast %1 : i32 to index
    %3 = memref.load %arg1[%2] : memref<16xi32, #tpu.memory_space<smem>>
    %c0_i32_0 = arith.constant 0 : i32
    %4 = arith.maxsi %3, %c0_i32_0 : i32
    %c10_i32 = arith.constant 10 : i32
    %5 = arith.minsi %4, %c10_i32 : i32
    %6 = arith.index_cast %5 : i32 to index
    %c0 = arith.constant 0 : index
    %7 = vector.load %arg2[%6, %c0] : memref<11x32xf32, #tpu.memory_space<vmem>>, vector<1x32xf32>
    %cst = arith.constant 5.65685415 : f32
    %8 = vector.broadcast %cst : f32 to vector<1x32xf32>
    %9 = arith.mulf %7, %8 : vector<1x32xf32>
    %10 = arith.index_cast %c0_i32 : i32 to index
    %c0_1 = arith.constant 0 : index
    %11 = vector.load %arg3[%10, %c0_1] : memref<8x32xf32, #tpu.memory_space<vmem>>, vector<1x32xf32>
    tpu.vector_store %arg3[%10, %c0_1], %9 {strides = array<i32>} : memref<8x32xf32, #tpu.memory_space<vmem>>, vector<1x32xf32>,
    %c1_i32 = arith.constant 1 : i32
    %12 = arith.addi %0, %c1_i32 : i32
    %13 = arith.index_cast %12 : i32 to index
    %14 = memref.load %arg1[%13] : memref<16xi32, #tpu.memory_space<smem>>
    %c0_i32_2 = arith.constant 0 : i32
    %15 = arith.maxsi %14, %c0_i32_2 : i32
    %c10_i32_3 = arith.constant 10 : i32
    %16 = arith.minsi %15, %c10_i32_3 : i32
    %17 = arith.index_cast %16 : i32 to index
    %c0_4 = arith.constant 0 : index
    %18 = vector.load %arg2[%17, %c0_4] : memref<11x32xf32, #tpu.memory_space<vmem>>, vector<1x32xf32>
    %cst_5 = arith.constant 5.65685415 : f32
    %19 = vector.broadcast %cst_5 : f32 to vector<1x32xf32>
    %20 = arith.mulf %18, %19 : vector<1x32xf32>
    %21 = arith.index_cast %c1_i32 : i32 to index
    %c0_6 = arith.constant 0 : index
    %22 = vector.load %arg3[%21, %c0_6] : memref<8x32xf32, #tpu.memory_space<vmem>>, vector<1x32xf32>
    tpu.vector_store %arg3[%21, %c0_6], %20 {strides = array<i32>} : memref<8x32xf32, #tpu.memory_space<vmem>>, vector<1x32xf32>,
    %c2_i32 = arith.constant 2 : i32
    %23 = arith.addi %0, %c2_i32 : i32
    %24 = arith.index_cast %23 : i32 to index
    %25 = memref.load %arg1[%24] : memref<16xi32, #tpu.memory_space<smem>>
    %c0_i32_7 = arith.constant 0 : i32
    %26 = arith.maxsi %25, %c0_i32_7 : i32
    %c10_i32_8 = arith.constant 10 : i32
    %27 = arith.minsi %26, %c10_i32_8 : i32
    %28 = arith.index_cast %27 : i32 to index
    %c0_9 = arith.constant 0 : index
    %29 = vector.load %arg2[%28, %c0_9] : memref<11x32xf32, #tpu.memory_space<vmem>>, vector<1x32xf32>
    %cst_10 = arith.constant 5.65685415 : f32
    %30 = vector.broadcast %cst_10 : f32 to vector<1x32xf32>
    %31 = arith.mulf %29, %30 : vector<1x32xf32>
    %32 = arith.index_cast %c2_i32 : i32 to index
    %c0_11 = arith.constant 0 : index
    %33 = vector.load %arg3[%32, %c0_11] : memref<8x32xf32, #tpu.memory_space<vmem>>, vector<1x32xf32>
    tpu.vector_store %arg3[%32, %c0_11], %31 {strides = array<i32>} : memref<8x32xf32, #tpu.memory_space<vmem>>, vector<1x32xf32>,
    %c3_i32 = arith.constant 3 : i32
    %34 = arith.addi %0, %c3_i32 : i32
    %35 = arith.index_cast %34 : i32 to index
    %36 = memref.load %arg1[%35] : memref<16xi32, #tpu.memory_space<smem>>
    %c0_i32_12 = arith.constant 0 : i32
    %37 = arith.maxsi %36, %c0_i32_12 : i32
    %c10_i32_13 = arith.constant 10 : i32
    %38 = arith.minsi %37, %c10_i32_13 : i32
    %39 = arith.index_cast %38 : i32 to index
    %c0_14 = arith.constant 0 : index
    %40 = vector.load %arg2[%39, %c0_14] : memref<11x32xf32, #tpu.memory_space<vmem>>, vector<1x32xf32>
    %cst_15 = arith.constant 5.65685415 : f32
    %41 = vector.broadcast %cst_15 : f32 to vector<1x32xf32>
    %42 = arith.mulf %40, %41 : vector<1x32xf32>
    %43 = arith.index_cast %c3_i32 : i32 to index
    %c0_16 = arith.constant 0 : index
    %44 = vector.load %arg3[%43, %c0_16] : memref<8x32xf32, #tpu.memory_space<vmem>>, vector<1x32xf32>
    tpu.vector_store %arg3[%43, %c0_16], %42 {strides = array<i32>} : memref<8x32xf32, #tpu.memory_space<vmem>>, vector<1x32xf32>,
    %c4_i32 = arith.constant 4 : i32
    %45 = arith.addi %0, %c4_i32 : i32
    %46 = arith.index_cast %45 : i32 to index
    %47 = memref.load %arg1[%46] : memref<16xi32, #tpu.memory_space<smem>>
    %c0_i32_17 = arith.constant 0 : i32
    %48 = arith.maxsi %47, %c0_i32_17 : i32
    %c10_i32_18 = arith.constant 10 : i32
    %49 = arith.minsi %48, %c10_i32_18 : i32
    %50 = arith.index_cast %49 : i32 to index
    %c0_19 = arith.constant 0 : index
    %51 = vector.load %arg2[%50, %c0_19] : memref<11x32xf32, #tpu.memory_space<vmem>>, vector<1x32xf32>
    %cst_20 = arith.constant 5.65685415 : f32
    %52 = vector.broadcast %cst_20 : f32 to vector<1x32xf32>
    %53 = arith.mulf %51, %52 : vector<1x32xf32>
    %54 = arith.index_cast %c4_i32 : i32 to index
    %c0_21 = arith.constant 0 : index
    %55 = vector.load %arg3[%54, %c0_21] : memref<8x32xf32, #tpu.memory_space<vmem>>, vector<1x32xf32>
    tpu.vector_store %arg3[%54, %c0_21], %53 {strides = array<i32>} : memref<8x32xf32, #tpu.memory_space<vmem>>, vector<1x32xf32>,
    %c5_i32 = arith.constant 5 : i32
    %56 = arith.addi %0, %c5_i32 : i32
    %57 = arith.index_cast %56 : i32 to index
    %58 = memref.load %arg1[%57] : memref<16xi32, #tpu.memory_space<smem>>
    %c0_i32_22 = arith.constant 0 : i32
    %59 = arith.maxsi %58, %c0_i32_22 : i32
    %c10_i32_23 = arith.constant 10 : i32
    %60 = arith.minsi %59, %c10_i32_23 : i32
    %61 = arith.index_cast %60 : i32 to index
    %c0_24 = arith.constant 0 : index
    %62 = vector.load %arg2[%61, %c0_24] : memref<11x32xf32, #tpu.memory_space<vmem>>, vector<1x32xf32>
    %cst_25 = arith.constant 5.65685415 : f32
    %63 = vector.broadcast %cst_25 : f32 to vector<1x32xf32>
    %64 = arith.mulf %62, %63 : vector<1x32xf32>
    %65 = arith.index_cast %c5_i32 : i32 to index
    %c0_26 = arith.constant 0 : index
    %66 = vector.load %arg3[%65, %c0_26] : memref<8x32xf32, #tpu.memory_space<vmem>>, vector<1x32xf32>
    tpu.vector_store %arg3[%65, %c0_26], %64 {strides = array<i32>} : memref<8x32xf32, #tpu.memory_space<vmem>>, vector<1x32xf32>,
    %c6_i32 = arith.constant 6 : i32
    %67 = arith.addi %0, %c6_i32 : i32
    %68 = arith.index_cast %67 : i32 to index
    %69 = memref.load %arg1[%68] : memref<16xi32, #tpu.memory_space<smem>>
    %c0_i32_27 = arith.constant 0 : i32
    %70 = arith.maxsi %69, %c0_i32_27 : i32
    %c10_i32_28 = arith.constant 10 : i32
    %71 = arith.minsi %70, %c10_i32_28 : i32
    %72 = arith.index_cast %71 : i32 to index
    %c0_29 = arith.constant 0 : index
    %73 = vector.load %arg2[%72, %c0_29] : memref<11x32xf32, #tpu.memory_space<vmem>>, vector<1x32xf32>
    %cst_30 = arith.constant 5.65685415 : f32
    %74 = vector.broadcast %cst_30 : f32 to vector<1x32xf32>
    %75 = arith.mulf %73, %74 : vector<1x32xf32>
    %76 = arith.index_cast %c6_i32 : i32 to index
    %c0_31 = arith.constant 0 : index
    %77 = vector.load %arg3[%76, %c0_31] : memref<8x32xf32, #tpu.memory_space<vmem>>, vector<1x32xf32>
    tpu.vector_store %arg3[%76, %c0_31], %75 {strides = array<i32>} : memref<8x32xf32, #tpu.memory_space<vmem>>, vector<1x32xf32>,
    %c7_i32 = arith.constant 7 : i32
    %78 = arith.addi %0, %c7_i32 : i32
    %79 = arith.index_cast %78 : i32 to index
    %80 = memref.load %arg1[%79] : memref<16xi32, #tpu.memory_space<smem>>
    %c0_i32_32 = arith.constant 0 : i32
    %81 = arith.maxsi %80, %c0_i32_32 : i32
    %c10_i32_33 = arith.constant 10 : i32
    %82 = arith.minsi %81, %c10_i32_33 : i32
    %83 = arith.index_cast %82 : i32 to index
    %c0_34 = arith.constant 0 : index
    %84 = vector.load %arg2[%83, %c0_34] : memref<11x32xf32, #tpu.memory_space<vmem>>, vector<1x32xf32>
    %cst_35 = arith.constant 5.65685415 : f32
    %85 = vector.broadcast %cst_35 : f32 to vector<1x32xf32>
    %86 = arith.mulf %84, %85 : vector<1x32xf32>
    %87 = arith.index_cast %c7_i32 : i32 to index
    %c0_36 = arith.constant 0 : index
    %88 = vector.load %arg3[%87, %c0_36] : memref<8x32xf32, #tpu.memory_space<vmem>>, vector<1x32xf32>
    tpu.vector_store %arg3[%87, %c0_36], %86 {strides = array<i32>} : memref<8x32xf32, #tpu.memory_space<vmem>>, vector<1x32xf32>,
    %c8_i32_37 = arith.constant 8 : i32
    return
  }
  func.func @transform_0(%arg0: i32, %arg1: memref<16xi32, #tpu.memory_space<smem>>) -> (i32, i32) {
    %c0_i32 = arith.constant 0 : i32
    %c0_i32_0 = arith.constant 0 : i32
    %c0_i32_1 = arith.constant 0 : i32
    return %c0_i32, %c0_i32_0 : i32, i32
  }
  func.func @transform_1(%arg0: i32, %arg1: memref<16xi32, #tpu.memory_space<smem>>) -> (i32, i32) {
    %c0_i32 = arith.constant 0 : i32
    %c0_i32_0 = arith.constant 0 : i32
    return %arg0, %c0_i32 : i32, i32
  }
}

</mosaic_0001>

<llo_original>
// kernel: tpu_custom_call.1
$region0: #{tpu_custom_call.1}
  #allocation0 [shape = 'u32[]', space=smem, size = 0x4, offset = 0x4, fixed_abs, tag = 'smem constant byte address 0x4 - core index']
  #allocation1 [shape = 'u32[144,128]{1,0:T(1,128)}', space=vmem, size = 0x12000, scoped, tag = 'internal scratch']
  #allocation2 [shape = 's32[1]{0}', space=sflag, size = 0x4, scoped, tag = 'scoped memory for tpu_custom_call.1']
  #allocation3 [shape = 'u8[512]{0}', space=smem, size = 0x200, scoped, tag = 'prefetched SMEM operand 0']
  %s0 = inlined_call_operand.hbm [shape: s32[16], index: 0, kind: input, shape index: {}]
  %s1 = inlined_call_operand.hbm [shape: f32[11,32], index: 1, kind: input, shape index: {}]
  %s2 = inlined_call_operand.hbm [shape: f32[16,32], index: 2, kind: output, shape index: {}]
  %s3 = sld [smem:[#allocation0]]
  $region41: #{tpu_custom_call.1} parent=0
    _
  %s5 = ssub.s32 1, %s3
  %s6 = scalar_select 0, %s5, %s3
  %8 = dma.hbm_to_smem %s0, 16, [#allocation3], [#allocation2]
  %9 = dma.done [#allocation2], 16
  %10 = sfence
  $region1: #{tpu_custom_call.1} parent=0
    #allocation4 [shape = 'u8[8192]{0}', space=vmem, size = 0x2000, scoped, tag = 'input window, operand 1, single buffered']
    #allocation5 [shape = 's32[2]{0}', space=sflag, size = 0x8, scoped, tag = 'scoped memory for tpu_custom_call.1']
    #allocation6 [shape = 's32[2]{0}', space=sflag, size = 0x8, scoped, tag = 'scoped memory for tpu_custom_call.1']
    #allocation7 [shape = 'u8[8192]{0}', space=vmem, size = 0x2000, scoped, tag = 'output window, operand 0']
    %11 = vsyncpa [#allocation5], 0
    %12 = vsyncpa [#allocation6], 0
    %s13 = scalar_lea.sflag [#allocation6], 1
    %14 = vsyncpa %s13, 0
    loop: start=0, step=1, limit=4
    $region2: #{tpu_custom_call.1} parent=1 // loop_pre_header
      _
    $region3: #{tpu_custom_call.1} parent=1 // loop_header
      %s16 = sphi 0, %s20
      %p17 = scmp.ge.s32.totalorder %s16, 4
      %s24 = sphi 0, %s24
      %s26 = sphi 0, %s24
      %s27 = sphi 0, %s26
      %s41 = sphi 0, %s27
      %s47 = sphi 0, %s49
      %s50 = sphi 0, %s47
      %s51 = sphi 0, %s50
      %s67 = sphi 0, %s51
    $region4: #{tpu_custom_call.1} parent=1 // loop_header_branch
      %19 = sbr.rel (%p17) target = $region8
    $region5: #{tpu_custom_call.1} parent=1 // loop_body
      %s21 = ssub.s32 %s16, 1
      %s22 = ssub.s32 %s16, 2
      %s23 = sadd.s32 %s16, 1
      %s25 = sadd.s32 %s24, 1
      %p28 = scmp.eq.s32.totalorder %s16, 1
      %p29 = scmp.ne.s32.totalorder %s24, %s26
      %p30 = scmp.eq.s32.totalorder %s16, 0
      %p31 = por %p29, %p30
      %p32 = scmp.ne.s32.totalorder %s24, %s26
      %p33 = scmp.eq.s32.totalorder %s21, 1
      %p34 = por %p32, %p33
      %p35 = scmp.ne.s32.totalorder %s26, %s27
      %p36 = scmp.eq.s32.totalorder %s21, 0
      %p37 = por %p35, %p36
      %p38 = scmp.ne.s32.totalorder %s26, %s27
      %p39 = scmp.eq.s32.totalorder %s22, 1
      %p40 = por %p38, %p39
      %p42 = scmp.ne.s32.totalorder %s27, %s41
      %p43 = scmp.eq.s32.totalorder %s22, 0
      %p44 = por %p42, %p43
      %s45 = ssub.s32 %s16, %s23
      %p46 = scmp.eq.s32.totalorder %s45, 0
      %s48 = sadd.s32 %s47, 1
      %s49 = scalar_select %p46, %s47, %s48
      %p52 = pneg %p46
      %p53 = scmp.eq.s32.totalorder %s16, 1
      %p54 = por %p52, %p53
      %p55 = scmp.ne.s32.totalorder %s47, %s50
      %p56 = scmp.eq.s32.totalorder %s16, 0
      %p57 = por %p55, %p56
      %p58 = scmp.ne.s32.totalorder %s47, %s50
      %p59 = scmp.eq.s32.totalorder %s21, 1
      %p60 = por %p58, %p59
      %p61 = scmp.ne.s32.totalorder %s50, %s51
      %p62 = scmp.eq.s32.totalorder %s21, 0
      %p63 = por %p61, %p62
      %p64 = scmp.ne.s32.totalorder %s50, %s51
      %p65 = scmp.eq.s32.totalorder %s22, 1
      %p66 = por %p64, %p65
      %p68 = scmp.ne.s32.totalorder %s51, %s67
      %p69 = scmp.eq.s32.totalorder %s22, 0
      %p70 = por %p68, %p69
      %p71 = scmp.le.s32.totalorder 1, %s16
      %p72 = scmp.lt.s32.totalorder %s16, 3
      %p73 = pnand %p71, %p72
      %p74 = pneg %p73
      // Predicated region
      $region9: #{tpu_custom_call.1} parent=5 // pred_check
        _
      $region10: #{tpu_custom_call.1} parent=5 // pred_check_branch
        %76 = sbr.rel (%p73) target = $region12
      $region11: #{tpu_custom_call.1} parent=5 // pred_region
        %s77 = ssub.s32 %s16, 1
        // Predicated region
        $region13: #{tpu_custom_call.1} parent=11 // pred_check
          %p78 = pneg %p37
        $region14: #{tpu_custom_call.1} parent=11 // pred_check_branch
          %80 = sbr.rel (%p78) target = $region16
        $region15: #{tpu_custom_call.1} parent=11 // pred_region
          %s82 = ssub.s32 256, 256
          %83 = vsyncadd [#allocation5], %s82
          %s84 = sshll.u32 [#allocation4], 4
          %s85 = int_to_ptr.vmem [resolvable:$true] %s84
          %90 = dma.hbm_to_vmem [thread:$0]  %s1, 256, %s85, [#allocation5], 128, 128, 8
        $region16: #{tpu_custom_call.1} parent=11 // pred_fallthru
          _
      $region12: #{tpu_custom_call.1} parent=5 // pred_fallthru
        _
      %p91 = scmp.lt.s32.totalorder %s16, 2
      // Predicated region
      $region17: #{tpu_custom_call.1} parent=5 // pred_check
        %p92 = pneg %p91
      $region18: #{tpu_custom_call.1} parent=5 // pred_check_branch
        %94 = sbr.rel (%p92) target = $region20
      $region19: #{tpu_custom_call.1} parent=5 // pred_region
        _
      $region20: #{tpu_custom_call.1} parent=5 // pred_fallthru
        _
      %p95 = scmp.le.s32.totalorder 1, %s16
      %p96 = scmp.lt.s32.totalorder %s16, 3
      %p97 = pnand %p95, %p96
      %p98 = pneg %p97
      // Predicated region
      $region21: #{tpu_custom_call.1} parent=5 // pred_check
        _
      $region22: #{tpu_custom_call.1} parent=5 // pred_check_branch
        %100 = sbr.rel (%p97) target = $region24
      $region23: #{tpu_custom_call.1} parent=5 // pred_region
        %s101 = ssub.s32 %s16, 1
        // Predicated region
        $region25: #{tpu_custom_call.1} parent=23 // pred_check
          %p102 = pneg %p37
        $region26: #{tpu_custom_call.1} parent=23 // pred_check_branch
          %104 = sbr.rel (%p102) target = $region28
        $region27: #{tpu_custom_call.1} parent=23 // pred_region
          %105 = dma.done [#allocation5], 256
        $region28: #{tpu_custom_call.1} parent=23 // pred_fallthru
          _
        %p106 = pneg %p37
        %p107 = pneg %p34
        %p108 = pneg %p63
        %p109 = pneg %p60
        %s110 = sand.u32 %s50, 1
        %s111 = scalar_lea.sflag [#allocation6], %s110
        %s112 = sand.u32 %s50, 1
        %s113 = smul.addr %s112, 8
        %s114 = scalar_lea.vmem [#allocation7], %s113
        %s115 = smul.u32 %s21, 8
        %s116 = sld [smem:[#allocation3 + %s115]]
        %p117 = scmp.gt.s32.totalorder %s116, 0
        %s118 = scalar_select %p117, %s116, 0
        %p119 = scmp.lt.s32.totalorder %s118, 10
        %s120 = scalar_select %p119, %s118, 10
        %s121 = scalar_lea.vmem [#allocation4], %s120
        %v122 = vld [vmem:[%s121] sm:$0x1]
        %v123 = vmul.f32 %v122, 5.656854
        %vm124 = vcmask 253952
        %125 = vst.msk [vmem:[%s114] sm:$0x1] %vm124, %v123
        %s126 = sadd.s32 %s115, 1
        %s127 = sld [smem:[#allocation3 + %s126]]
        %p128 = scmp.gt.s32.totalorder %s127, 0
        %s129 = scalar_select %p128, %s127, 0
        %p130 = scmp.lt.s32.totalorder %s129, 10
        %s131 = scalar_select %p130, %s129, 10
        %s132 = scalar_lea.vmem [#allocation4], %s131
        %v133 = vld [vmem:[%s132] sm:$0x1]
        %v134 = vmul.f32 %v133, 5.656854
        %135 = vst.msk [vmem:[%s114 + $0x1] sm:$0x1] %vm124, %v134
        %s136 = sadd.s32 %s115, 2
        %s137 = sld [smem:[#allocation3 + %s136]]
        %p138 = scmp.gt.s32.totalorder %s137, 0
        %s139 = scalar_select %p138, %s137, 0
        %p140 = scmp.lt.s32.totalorder %s139, 10
        %s141 = scalar_select %p140, %s139, 10
        %s142 = scalar_lea.vmem [#allocation4], %s141
        %v143 = vld [vmem:[%s142] sm:$0x1]
        %v144 = vmul.f32 %v143, 5.656854
        %145 = vst.msk [vmem:[%s114 + $0x2] sm:$0x1] %vm124, %v144
        %s146 = sadd.s32 %s115, 3
        %s147 = sld [smem:[#allocation3 + %s146]]
        %p148 = scmp.gt.s32.totalorder %s147, 0
        %s149 = scalar_select %p148, %s147, 0
        %p150 = scmp.lt.s32.totalorder %s149, 10
        %s151 = scalar_select %p150, %s149, 10
        %s152 = scalar_lea.vmem [#allocation4], %s151
        %v153 = vld [vmem:[%s152] sm:$0x1]
        %v154 = vmul.f32 %v153, 5.656854
        %155 = vst.msk [vmem:[%s114 + $0x3] sm:$0x1] %vm124, %v154
        %s156 = sadd.s32 %s115, 4
        %s157 = sld [smem:[#allocation3 + %s156]]
        %p158 = scmp.gt.s32.totalorder %s157, 0
        %s159 = scalar_select %p158, %s157, 0
        %p160 = scmp.lt.s32.totalorder %s159, 10
        %s161 = scalar_select %p160, %s159, 10
        %s162 = scalar_lea.vmem [#allocation4], %s161
        %v163 = vld [vmem:[%s162] sm:$0x1]
        %v164 = vmul.f32 %v163, 5.656854
        %165 = vst.msk [vmem:[%s114 + $0x4] sm:$0x1] %vm124, %v164
        %s166 = sadd.s32 %s115, 5
        %s167 = sld [smem:[#allocation3 + %s166]]
        %p168 = scmp.gt.s32.totalorder %s167, 0
        %s169 = scalar_select %p168, %s167, 0
        %p170 = scmp.lt.s32.totalorder %s169, 10
        %s171 = scalar_select %p170, %s169, 10
        %s172 = scalar_lea.vmem [#allocation4], %s171
        %v173 = vld [vmem:[%s172] sm:$0x1]
        %v174 = vmul.f32 %v173, 5.656854
        %175 = vst.msk [vmem:[%s114 + $0x5] sm:$0x1] %vm124, %v174
        %s176 = sadd.s32 %s115, 6
        %s177 = sld [smem:[#allocation3 + %s176]]
        %p178 = scmp.gt.s32.totalorder %s177, 0
        %s179 = scalar_select %p178, %s177, 0
        %p180 = scmp.lt.s32.totalorder %s179, 10
        %s181 = scalar_select %p180, %s179, 10
        %s182 = scalar_lea.vmem [#allocation4], %s181
        %v183 = vld [vmem:[%s182] sm:$0x1]
        %v184 = vmul.f32 %v183, 5.656854
        %185 = vst.msk [vmem:[%s114 + $0x6] sm:$0x1] %vm124, %v184
        %s186 = sadd.s32 %s115, 7
        %s187 = sld [smem:[#allocation3 + %s186]]
        %p188 = scmp.gt.s32.totalorder %s187, 0
        %s189 = scalar_select %p188, %s187, 0
        %p190 = scmp.lt.s32.totalorder %s189, 10
        %s191 = scalar_select %p190, %s189, 10
        %s192 = scalar_lea.vmem [#allocation4], %s191
        %v193 = vld [vmem:[%s192] sm:$0x1]
        %v194 = vmul.f32 %v193, 5.656854
        %195 = vst.msk [vmem:[%s114 + $0x7] sm:$0x1] %vm124, %v194
        %s196 = sand.u32 %s50, 1
        %s197 = scalar_lea.sflag [#allocation6], %s196
        %s198 = sand.u32 %s50, 1
        %s199 = smul.addr %s198, 8
        %s200 = scalar_lea.vmem [#allocation7], %s199
        // Predicated region
        $region29: #{tpu_custom_call.1} parent=23 // pred_check
          %p201 = pneg %p60
        $region30: #{tpu_custom_call.1} parent=23 // pred_check_branch
          %203 = sbr.rel (%p201) target = $region32
        $region31: #{tpu_custom_call.1} parent=23 // pred_region
          %s205 = ssub.s32 128, 128
          %206 = vsyncadd %s197, %s205
          %s207 = smul.addr %s21, 128
          %s208 = scalar_lea.hbm %s2, %s207
          %s210 = sshll.u32 %s200, 4
          %s211 = int_to_ptr.vmem [resolvable:$true] %s210
          %213 = dma.vmem_to_hbm [thread:$0]  %s211, 128, %s208, %s197
        $region32: #{tpu_custom_call.1} parent=23 // pred_fallthru
          _
      $region24: #{tpu_custom_call.1} parent=5 // pred_fallthru
        _
      %p214 = scmp.le.s32.totalorder 2, %s16
      // Predicated region
      $region33: #{tpu_custom_call.1} parent=5 // pred_check
        %p215 = pneg %p214
      $region34: #{tpu_custom_call.1} parent=5 // pred_check_branch
        %217 = sbr.rel (%p215) target = $region36
      $region35: #{tpu_custom_call.1} parent=5 // pred_region
        %s218 = ssub.s32 %s16, 2
        // Predicated region
        $region37: #{tpu_custom_call.1} parent=35 // pred_check
          %p219 = pneg %p66
        $region38: #{tpu_custom_call.1} parent=35 // pred_check_branch
          %221 = sbr.rel (%p219) target = $region40
        $region39: #{tpu_custom_call.1} parent=35 // pred_region
          %s222 = sand.u32 %s51, 1
          %s223 = scalar_lea.sflag [#allocation6], %s222
          %s224 = sand.u32 %s51, 1
          %s225 = smul.addr %s224, 8
          %s226 = scalar_lea.vmem [#allocation7], %s225
          %227 = dma.done %s223, 128
        $region40: #{tpu_custom_call.1} parent=35 // pred_fallthru
          _
      $region36: #{tpu_custom_call.1} parent=5 // pred_fallthru
        _
    $region6: #{tpu_custom_call.1} parent=1 // loop_footer
      %s20 = sadd.s32 1, %s16
    $region7: #{tpu_custom_call.1} parent=1 // loop_footer_branch
      %15 = sbr.rel target = $region3
    $region8: #{tpu_custom_call.1} parent=1 // loop_exit
      _
    %228 = vsyncpa [#allocation5], 1
    %s229 = scalar_lea.sflag [#allocation5], 1
    %230 = vsyncpa %s229, 1
    %231 = vsyncpa [#allocation6], 1
    %s232 = scalar_lea.sflag [#allocation6], 1
    %233 = vsyncpa %s232, 1

</llo_original>
